<compile_context>
chip_gen: v7x
topology: tpu7x:2x2x1
jax: 0.10.0
libtpu: 0.0.40
codegen_flags: <defaults>
</compile_context>

<pallas_src>
import functools

import jax
import jax.numpy as jnp
from jax.experimental import pallas as pl
from jax.experimental.pallas import tpu as pltpu

LANES = 128


def _int_pow(x, ip):
    """x ** ip for a static positive integer ip, via unrolled VPU multiplies."""
    result = None
    while ip > 0:
        if ip & 1:
            result = x if result is None else result * x
        ip >>= 1
        if ip:
            x = x * x
    return result


def _weight_from_target(t, weight_pow):
    """|t| ** weight_pow (f32), specialized to avoid EUP exp/log chains."""
    p = float(weight_pow)
    if p.is_integer() and p >= 1.0:
        ip = int(p)
        base = t if ip % 2 == 0 else jnp.abs(t)      # even powers: no abs needed
        return _int_pow(base, ip)
    if (2.0 * p).is_integer() and p > 0.0:
        # half-integer exponent: |t|**(k+0.5) = sqrt(|t|) * |t|**k
        k = int(p - 0.5)
        at = jnp.abs(t)
        s = jnp.sqrt(at)
        return s if k == 0 else s * _int_pow(at, k)
    at = jnp.abs(t)
    # Guard 0**p against an exp(p*log(0)) lowering producing NaN.
    return jnp.where(at == 0.0, 0.0, at ** p)


def _loss_kernel(d_ref, t_ref, acc_d_ref, acc_w_ref, *, weight_pow, rows,
                 tile_rows, chunk_rows, blocks_per_split, needs_mask):
    c = pl.program_id(0)          # split axis (core-parallel on v7x)
    i = pl.program_id(1)          # reduction axis ("arbitrary", innermost)

    @pl.when(i == 0)
    def _():
        acc_d_ref[...] = jnp.zeros_like(acc_d_ref)
        acc_w_ref[...] = jnp.zeros_like(acc_w_ref)

    blk = c * blocks_per_split + i          # nominal (unclamped) block index
    n_chunks = tile_rows // chunk_rows
    g = chunk_rows // 8

    def partial_sums(masked):
        """Fold this (tile_rows,128) tile into two (8,128) register partials."""

        def body(k, carry):
            pd, pw = carry
            r0 = pl.multiple_of(k * chunk_rows, chunk_rows)
            t = t_ref[pl.ds(r0, chunk_rows), :].astype(jnp.float32)
            d = d_ref[pl.ds(r0, chunk_rows), :].astype(jnp.float32)
            if masked:
                # Row-only mask: rows < `rows` are fully valid; rows past it
                # are overhang / clamped-duplicate garbage (possibly NaN), so
                # BOTH t and d are zeroed there (contribute exactly 0).
                row = jax.lax.broadcasted_iota(jnp.int32, (chunk_rows, LANES), 0)
                valid = (blk * tile_rows + r0 + row) < rows
                t = jnp.where(valid, t, 0.0)
                d = jnp.where(valid, d, 0.0)
            w = _weight_from_target(t, weight_pow)
            diff = jnp.abs(d - t) * w
            # (chunk,128) -> (8,128): pure VALU adds across sublane-aligned vregs.
            pd = pd + diff.reshape(g, 8, LANES).sum(axis=0)
            pw = pw + w.reshape(g, 8, LANES).sum(axis=0)
            return pd, pw

        init = (jnp.zeros((8, LANES), jnp.float32),
                jnp.zeros((8, LANES), jnp.float32))
        if n_chunks == 1:
            return body(0, init)
        return jax.lax.fori_loop(0, n_chunks, body, init, unroll=2)

    if needs_mask:
        # Scalar-gate the mask: only the rare edge / duplicate blocks pay for
        # the iota + selects; interior blocks take the lean path.
        interior = (blk + 1) * tile_rows <= rows

        @pl.when(interior)
        def _():
            pd, pw = partial_sums(masked=False)
            acc_d_ref[...] += pd
            acc_w_ref[...] += pw

        @pl.when(jnp.logical_not(interior))
        def _():
            pd, pw = partial_sums(masked=True)
            acc_d_ref[...] += pd
            acc_w_ref[...] += pw
    else:
        pd, pw = partial_sums(masked=False)
        acc_d_ref[...] += pd
        acc_w_ref[...] += pw


def _chip_defaults():
    """Per-generation defaults: tile_rows, num_splits, multi_core, VMEM budget."""
    kind = ""
    try:
        kind = jax.devices()[0].device_kind.lower()
    except Exception:
        pass
    if "v7" in kind:
        # 2 TensorCores, ~3.2 TB/s HBM, 32 MiB scoped-VMEM default (64 MiB phys).
        return dict(tile_rows=8192, num_splits=2, multi_core=True,
                    vmem_budget=24 << 20)
    if "v6" in kind:
        # 1 TC, 32 MiB scoped-VMEM default.
        return dict(tile_rows=8192, num_splits=1, multi_core=False,
                    vmem_budget=24 << 20)
    # v5e (16 MiB scoped-VMEM default, ~820 GB/s HBM) and unknown chips.
    return dict(tile_rows=4096, num_splits=1, multi_core=False,
                vmem_budget=12 << 20)


def target_weighted_l1_loss(data, target, weight_pow, *, tile_rows=None,
                            num_splits=None):
    """sum(|data-target| * |target|**p) / sum(|target|**p) via a Pallas kernel.

    NOTE: if every target element is zero the division yields NaN, matching
    the PyTorch reference behavior.
    """
    assert weight_pow > 0, "weight_pow must be a positive number!"
    assert data.shape == target.shape

    cfg = _chip_defaults()
    if tile_rows is None:
        tile_rows = cfg["tile_rows"]
    if num_splits is None:
        num_splits = cfg["num_splits"]

    n = data.size
    rows = n // LANES
    rem = n - rows * LANES

    flat_d = jnp.ravel(data)      # free reshape for contiguous inputs
    flat_t = jnp.ravel(target)

    # Sub-128-element tail: tiny wrapper-side partial sums (replaces the old
    # O(n) jnp.pad copy for the bulk).
    tail_diff = jnp.float32(0.0)
    tail_w = jnp.float32(0.0)
    if rem:
        td = flat_d[rows * LANES:].astype(jnp.float32)
        tt = flat_t[rows * LANES:].astype(jnp.float32)
        tw = jnp.where(jnp.abs(tt) == 0.0, 0.0, jnp.abs(tt) ** float(weight_pow))
        tail_w = jnp.sum(tw)
        tail_diff = jnp.sum(jnp.abs(td - tt) * tw)

    if rows == 0:
        return tail_diff / tail_w

    if rem:
        # TODO(synk): this bulk slice still materializes one copy in XLA when
        # n % 128 != 0; a manual-DMA tail path would make it fully zero-copy.
        d2 = flat_d[: rows * LANES].reshape(rows, LANES)
        t2 = flat_t[: rows * LANES].reshape(rows, LANES)
    else:
        d2 = flat_d.reshape(rows, LANES)   # zero-copy
        t2 = flat_t.reshape(rows, LANES)

    # Cap tile so 2 inputs x 2 pipeline buffers stay inside the per-chip
    # scoped-VMEM budget (no vmem_limit_bytes override needed).
    itemsize = max(data.dtype.itemsize, target.dtype.itemsize)
    tr_cap = max(8, (cfg["vmem_budget"] // (4 * LANES * itemsize)) // 8 * 8)
    tr = min(int(tile_rows), tr_cap, pl.cdiv(rows, 8) * 8)
    tr = max(8, (tr // 8) * 8)

    nblocks = pl.cdiv(rows, tr)
    nsplit = max(1, min(int(num_splits), nblocks))
    bps = pl.cdiv(nblocks, nsplit)          # blocks per split
    # Mask only if some block overhangs the real row count (partial last block
    # or clamped duplicate blocks from split padding).
    needs_mask = nsplit * bps * tr > rows

    chunk_rows = 64 if tr % 64 == 0 else tr   # vreg-friendly inner chunk

    kernel = functools.partial(
        _loss_kernel,
        weight_pow=float(weight_pow),
        rows=rows,
        tile_rows=tr,
        chunk_rows=chunk_rows,
        blocks_per_split=bps,
        needs_mask=needs_mask,
    )

    def in_map(c, i):
        blk = c * bps + i
        # Clamp nominally-out-of-range blocks onto the last real block; their
        # contribution is fully masked in-kernel and the DMA stays in bounds.
        return (jnp.minimum(blk, nblocks - 1), 0)

    def out_map(c, i):
        return (c, 0)

    grid_spec = pltpu.PrefetchScalarGridSpec(
        num_scalar_prefetch=0,
        grid=(nsplit, bps),
        in_specs=[
            pl.BlockSpec((tr, LANES), in_map),
            pl.BlockSpec((tr, LANES), in_map),
        ],
        out_specs=(
            pl.BlockSpec((8, LANES), out_map),
            pl.BlockSpec((8, LANES), out_map),
        ),
    )
    out_shape = (
        jax.ShapeDtypeStruct((nsplit * 8, LANES), jnp.float32),
        jax.ShapeDtypeStruct((nsplit * 8, LANES), jnp.float32),
    )

    # Prefer genuine per-TensorCore sharding of the split axis on multi-core
    # chips (v7x); fall back to plain PARALLEL if that lowering is rejected.
    if nsplit > 1 and cfg["multi_core"]:
        semantics_options = [
            (pltpu.CORE_PARALLEL, pltpu.ARBITRARY),
            (pltpu.PARALLEL, pltpu.ARBITRARY),
        ]
    else:
        semantics_options = [(pltpu.PARALLEL, pltpu.ARBITRARY)]

    result = None
    last_err = None
    for sem in semantics_options:
        try:
            result = pl.pallas_call(
                kernel,
                out_shape=out_shape,
                grid_spec=grid_spec,
                compiler_params=pltpu.CompilerParams(dimension_semantics=sem),
            )(d2, t2)
            if len(semantics_options) > 1:
                jax.block_until_ready(result)
            break
        except Exception as e:      # pragma: no cover - lowering fallback
            last_err = e
            result = None
    if result is None:
        raise last_err
    acc_diff, acc_w = result

    # Single cheap cross-lane reduce of the (nsplit*8, 128) partials.
    total_diff = jnp.sum(acc_diff) + tail_diff
    total_w = jnp.sum(acc_w) + tail_w
    return total_diff / total_w


def _reference(data, target, weight_pow):
    weight = jnp.abs(target) ** weight_pow
    diff = jnp.abs(data - target) * weight
    return diff.sum() / weight.sum()


if __name__ == "__main__":
    key = jax.random.PRNGKey(0)
    k1, k2, k3, k4 = jax.random.split(key, 4)

    # Primary case: NCHW-like image-reconstruction loss, integer weight_pow.
    data = jax.random.normal(k1, (2, 4, 16, 16), dtype=jnp.float32)
    target = jax.random.normal(k2, (2, 4, 16, 16), dtype=jnp.float32)
    out = jax.block_until_ready(target_weighted_l1_loss(data, target, 2.0))
    ref = _reference(data, target, 2.0)
    assert jnp.allclose(out, ref, rtol=1e-5, atol=1e-5), (out, ref)

    # Unaligned case: exercises masked edge block + wrapper-side tail, with a
    # half-integer weight_pow (sqrt + integer-power specialization).
    data2 = jax.random.normal(k3, (3, 5, 7, 11), dtype=jnp.float32)
    target2 = jax.random.normal(k4, (3, 5, 7, 11), dtype=jnp.float32)
    out2 = jax.block_until_ready(target_weighted_l1_loss(data2, target2, 1.5))
    ref2 = _reference(data2, target2, 1.5)
    assert jnp.allclose(out2, ref2, rtol=1e-5, atol=1e-5), (out2, ref2)

    # Tiny (< 128 element) case: pure wrapper-side path.
    d3 = data2[:1, :1, :5, :7]
    t3 = target2[:1, :1, :5, :7]
    out3 = jax.block_until_ready(target_weighted_l1_loss(d3, t3, 2.0))
    ref3 = _reference(d3, t3, 2.0)
    assert jnp.allclose(out3, ref3, rtol=1e-5, atol=1e-5), (out3, ref3)

    print("KERNEL_OK")
</pallas_src>

<mosaic_0001>
module attributes {stable_mosaic.version = 11 : i64} {
  func.func @_loss_kernel(%arg0: i32, %arg1: i32, %arg2: memref<16x128xf32, #tpu.memory_space<vmem>>, %arg3: memref<16x128xf32, #tpu.memory_space<vmem>>, %arg4: memref<8x128xf32, #tpu.memory_space<vmem>>, %arg5: memref<8x128xf32, #tpu.memory_space<vmem>>) attributes {dimension_semantics = [#tpu.dimension_semantics<parallel>, #tpu.dimension_semantics<arbitrary>], iteration_bounds = array<i64: 1, 1>, scalar_prefetch = 0 : i64, scratch_operands = 0 : i64, tpu.core_type = #tpu.core_type<tc>, window_params = [{transform_indices = @transform_0, window_bounds = array<i64: 16, 128>}, {transform_indices = @transform_1, window_bounds = array<i64: 16, 128>}, {transform_indices = @transform_2, window_bounds = array<i64: 8, 128>}, {transform_indices = @transform_3, window_bounds = array<i64: 8, 128>}]} {
    %c0_i32 = arith.constant 0 : i32
    %0 = arith.cmpi eq, %arg1, %c0_i32 : i32
    %1 = arith.extui %0 : i1 to i32
    %c0_i32_0 = arith.constant 0 : i32
    %2 = arith.cmpi ne, %1, %c0_i32_0 : i32
    scf.if %2 {
      %cst_14 = arith.constant 0.000000e+00 : f32
      %26 = vector.broadcast %cst_14 : f32 to vector<8x128xf32>
      %c0_15 = arith.constant 0 : index
      %c0_16 = arith.constant 0 : index
      %27 = vector.load %arg4[%c0_15, %c0_16] : memref<8x128xf32, #tpu.memory_space<vmem>>, vector<8x128xf32>
      tpu.vector_store %arg4[%c0_15, %c0_16], %26 {strides = array<i32>} : memref<8x128xf32, #tpu.memory_space<vmem>>, vector<8x128xf32>,
      %cst_17 = arith.constant 0.000000e+00 : f32
      %28 = vector.broadcast %cst_17 : f32 to vector<8x128xf32>
      %c0_18 = arith.constant 0 : index
      %c0_19 = arith.constant 0 : index
      %29 = vector.load %arg5[%c0_18, %c0_19] : memref<8x128xf32, #tpu.memory_space<vmem>>, vector<8x128xf32>
      tpu.vector_store %arg5[%c0_18, %c0_19], %28 {strides = array<i32>} : memref<8x128xf32, #tpu.memory_space<vmem>>, vector<8x128xf32>,
    } else {
    }
    %cst = arith.constant 0.000000e+00 : f32
    %3 = vector.broadcast %cst : f32 to vector<8x128xf32>
    %cst_1 = arith.constant 0.000000e+00 : f32
    %4 = vector.broadcast %cst_1 : f32 to vector<8x128xf32>
    %c0_i32_2 = arith.constant 0 : i32
    %5 = tpu.assume_multiple %c0_i32_2, 16 : i32
    %6 = arith.index_cast %5 : i32 to index
    %c0 = arith.constant 0 : index
    %7 = vector.load %arg3[%6, %c0] : memref<16x128xf32, #tpu.memory_space<vmem>>, vector<16x128xf32>
    %8 = arith.index_cast %5 : i32 to index
    %c0_3 = arith.constant 0 : index
    %9 = vector.load %arg2[%8, %c0_3] : memref<16x128xf32, #tpu.memory_space<vmem>>, vector<16x128xf32>
    %10 = arith.mulf %7, %7 : vector<16x128xf32>
    %11 = arith.subf %9, %7 : vector<16x128xf32>
    %12 = math.absf %11 : vector<16x128xf32>
    %13 = arith.mulf %12, %10 : vector<16x128xf32>
    %14 = vector.shape_cast %13 : vector<16x128xf32> to vector<2x8x128xf32>
    %cst_4 = arith.constant dense<0.000000e+00> : vector<8x128xf32>
    %15 = vector.multi_reduction <add>, %14, %cst_4 [0] : vector<2x8x128xf32> to vector<8x128xf32>
    %16 = arith.addf %3, %15 : vector<8x128xf32>
    %17 = vector.shape_cast %10 : vector<16x128xf32> to vector<2x8x128xf32>
    %cst_5 = arith.constant dense<0.000000e+00> : vector<8x128xf32>
    %18 = vector.multi_reduction <add>, %17, %cst_5 [0] : vector<2x8x128xf32> to vector<8x128xf32>
    %19 = arith.addf %4, %18 : vector<8x128xf32>
    %c0_6 = arith.constant 0 : index
    %c0_7 = arith.constant 0 : index
    %20 = vector.load %arg4[%c0_6, %c0_7] : memref<8x128xf32, #tpu.memory_space<vmem>>, vector<8x128xf32>
    %21 = arith.addf %20, %16 : vector<8x128xf32>
    %c0_8 = arith.constant 0 : index
    %c0_9 = arith.constant 0 : index
    %22 = vector.load %arg4[%c0_8, %c0_9] : memref<8x128xf32, #tpu.memory_space<vmem>>, vector<8x128xf32>
    tpu.vector_store %arg4[%c0_8, %c0_9], %21 {strides = array<i32>} : memref<8x128xf32, #tpu.memory_space<vmem>>, vector<8x128xf32>,
    %c0_10 = arith.constant 0 : index
    %c0_11 = arith.constant 0 : index
    %23 = vector.load %arg5[%c0_10, %c0_11] : memref<8x128xf32, #tpu.memory_space<vmem>>, vector<8x128xf32>
    %24 = arith.addf %23, %19 : vector<8x128xf32>
    %c0_12 = arith.constant 0 : index
    %c0_13 = arith.constant 0 : index
    %25 = vector.load %arg5[%c0_12, %c0_13] : memref<8x128xf32, #tpu.memory_space<vmem>>, vector<8x128xf32>
    tpu.vector_store %arg5[%c0_12, %c0_13], %24 {strides = array<i32>} : memref<8x128xf32, #tpu.memory_space<vmem>>, vector<8x128xf32>,
    return
  }
  func.func @transform_0(%arg0: i32, %arg1: i32) -> (i32, i32) {
    %c1_i32 = arith.constant 1 : i32
    %0 = arith.muli %arg0, %c1_i32 : i32
    %1 = arith.addi %0, %arg1 : i32
    %c0_i32 = arith.constant 0 : i32
    %2 = arith.minsi %1, %c0_i32 : i32
    %c0_i32_0 = arith.constant 0 : i32
    %c0_i32_1 = arith.constant 0 : i32
    return %2, %c0_i32_0 : i32, i32
  }
  func.func @transform_1(%arg0: i32, %arg1: i32) -> (i32, i32) {
    %c1_i32 = arith.constant 1 : i32
    %0 = arith.muli %arg0, %c1_i32 : i32
    %1 = arith.addi %0, %arg1 : i32
    %c0_i32 = arith.constant 0 : i32
    %2 = arith.minsi %1, %c0_i32 : i32
    %c0_i32_0 = arith.constant 0 : i32
    %c0_i32_1 = arith.constant 0 : i32
    return %2, %c0_i32_0 : i32, i32
  }
  func.func @transform_2(%arg0: i32, %arg1: i32) -> (i32, i32) {
    %c0_i32 = arith.constant 0 : i32
    %c0_i32_0 = arith.constant 0 : i32
    return %arg0, %c0_i32 : i32, i32
  }
  func.func @transform_3(%arg0: i32, %arg1: i32) -> (i32, i32) {
    %c0_i32 = arith.constant 0 : i32
    %c0_i32_0 = arith.constant 0 : i32
    return %arg0, %c0_i32 : i32, i32
  }
}

</mosaic_0001>

<llo_original>
// kernel: tpu_custom_call.1
$region0: #{tpu_custom_call.1}
  #allocation0 [shape = 'u32[]', space=smem, size = 0x4, offset = 0x4, fixed_abs, tag = 'smem constant byte address 0x4 - core index']
  #allocation1 [shape = 'u32[144,128]{1,0:T(1,128)}', space=vmem, size = 0x12000, scoped, tag = 'internal scratch']
  %s0 = inlined_call_operand.hbm [shape: f32[16,128], index: 0, kind: input, shape index: {}]
  %s1 = inlined_call_operand.hbm [shape: f32[16,128], index: 1, kind: input, shape index: {}]
  %s2 = inlined_call_operand.hbm [shape: f32[8,128], index: 2, kind: output, shape index: {0}]
  %s3 = inlined_call_operand.hbm [shape: f32[8,128], index: 3, kind: output, shape index: {1}]
  %4 = xla_tuple %s2, %s3
  %s5 = sld [smem:[#allocation0]]
  $region38: #{tpu_custom_call.1} parent=0
    _
  %s7 = ssub.s32 1, %s5
  %s8 = scalar_select 0, %s7, %s5
  $region1: #{tpu_custom_call.1} parent=0
    #allocation2 [shape = 'u8[8192]{0}', space=vmem, size = 0x2000, scoped, tag = 'input window, operand 0, single buffered']
    #allocation3 [shape = 's32[1]{0}', space=sflag, size = 0x4, scoped, tag = 'scoped memory for tpu_custom_call.1']
    #allocation4 [shape = 's32[1]{0}', space=sflag, size = 0x4, scoped, tag = 'scoped memory for tpu_custom_call.1']
    #allocation5 [shape = 'u8[8192]{0}', space=vmem, size = 0x2000, scoped, tag = 'input window, operand 1, single buffered']
    #allocation6 [shape = 's32[1]{0}', space=sflag, size = 0x4, scoped, tag = 'scoped memory for tpu_custom_call.1']
    #allocation7 [shape = 'u8[4096]{0}', space=vmem, size = 0x1000, scoped, tag = 'output window, operand 0, single buffered']
    #allocation8 [shape = 'u8[4096]{0}', space=vmem, size = 0x1000, scoped, tag = 'output window, operand 1, single buffered']
    #allocation9 [shape = 's32[1]{0}', space=sflag, size = 0x4, scoped, tag = 'scoped memory for tpu_custom_call.1']
    %9 = vsyncpa [#allocation3], 0
    %10 = vsyncpa [#allocation6], 0
    %11 = vsyncpa [#allocation4], 0
    %12 = vsyncpa [#allocation9], 0
    // Predicated region
    $region2: #{tpu_custom_call.1} parent=1 // pred_check
      _
    $region3: #{tpu_custom_call.1} parent=1 // pred_check_branch
      %14 = sbr.rel (0) target = $region5
    $region4: #{tpu_custom_call.1} parent=1 // pred_region
      %s15 = sadd.s32 0, 0
      %p16 = scmp.lt.s32.totalorder %s15, 0
      %s17 = scalar_select %p16, %s15, 0
      %s18 = smul.u32 2, %s17
      %s20 = ssub.s32 256, 256
      %21 = vsyncadd [#allocation3], %s20
      %s22 = smul.addr %s18, 128
      %s23 = scalar_lea.hbm %s0, %s22
      %s24 = sshll.u32 [#allocation2], 4
      %s25 = int_to_ptr.vmem [resolvable:$true] %s24
      %30 = dma.hbm_to_vmem [thread:$0]  %s23, 256, %s25, [#allocation3], 128, 128, 8
    $region5: #{tpu_custom_call.1} parent=1 // pred_fallthru
      _
    // Predicated region
    $region6: #{tpu_custom_call.1} parent=1 // pred_check
      _
    $region7: #{tpu_custom_call.1} parent=1 // pred_check_branch
      %32 = sbr.rel (0) target = $region9
    $region8: #{tpu_custom_call.1} parent=1 // pred_region
      %s33 = sadd.s32 0, 0
      %p34 = scmp.lt.s32.totalorder %s33, 0
      %s35 = scalar_select %p34, %s33, 0
      %s36 = smul.u32 2, %s35
      %s38 = ssub.s32 256, 256
      %39 = vsyncadd [#allocation6], %s38
      %s40 = smul.addr %s36, 128
      %s41 = scalar_lea.hbm %s1, %s40
      %s42 = sshll.u32 [#allocation5], 4
      %s43 = int_to_ptr.vmem [resolvable:$true] %s42
      %48 = dma.hbm_to_vmem [thread:$0]  %s41, 256, %s43, [#allocation6], 128, 128, 8
    $region9: #{tpu_custom_call.1} parent=1 // pred_fallthru
      _
    // Predicated region
    $region10: #{tpu_custom_call.1} parent=1 // pred_check
      _
    $region11: #{tpu_custom_call.1} parent=1 // pred_check_branch
      %50 = sbr.rel (0) target = $region13
    $region12: #{tpu_custom_call.1} parent=1 // pred_region
      %51 = dma.done [#allocation3], 256
    $region13: #{tpu_custom_call.1} parent=1 // pred_fallthru
      _
    // Predicated region
    $region14: #{tpu_custom_call.1} parent=1 // pred_check
      _
    $region15: #{tpu_custom_call.1} parent=1 // pred_check_branch
      %53 = sbr.rel (0) target = $region17
    $region16: #{tpu_custom_call.1} parent=1 // pred_region
      %54 = dma.done [#allocation6], 256
    $region17: #{tpu_custom_call.1} parent=1 // pred_fallthru
      _
    %s55 = sadd.s32 0, 0
    %p56 = scmp.lt.s32.totalorder %s55, 0
    %s57 = scalar_select %p56, %s55, 0
    %s58 = smul.u32 2, %s57
    %s59 = sadd.s32 0, 0
    %p60 = scmp.lt.s32.totalorder %s59, 0
    %s61 = scalar_select %p60, %s59, 0
    %s62 = smul.u32 2, %s61
    %p63 = scmp.eq.s32.totalorder 0, 0
    // Predicated region
    $region18: #{tpu_custom_call.1} parent=1 // pred_check
      %p64 = pneg %p63
    $region19: #{tpu_custom_call.1} parent=1 // pred_check_branch
      %66 = sbr.rel (%p64) target = $region21
    $region20: #{tpu_custom_call.1} parent=1 // pred_region
      %67 = vst [vmem:[#allocation7] sm:$0xff] 0.0
      %68 = vst [vmem:[#allocation8] sm:$0xff] 0.0
    $region21: #{tpu_custom_call.1} parent=1 // pred_fallthru
      _
    %v69 = vld [vmem:[#allocation5] sm:$0xff]
    %v70 = vld [vmem:[#allocation5 + $0x8] sm:$0xff]
    %v71 = vld [vmem:[#allocation2] sm:$0xff]
    %v72 = vld [vmem:[#allocation2 + $0x8] sm:$0xff]
    %v73 = vmul.f32 %v69, %v69
    %v74 = vmul.f32 %v70, %v70
    %v75 = vsub.f32 %v71, %v69
    %v76 = vsub.f32 %v72, %v70
    %v77 = vand.u32 2147483647, %v75
    %v78 = vand.u32 2147483647, %v76
    %v79 = vmul.f32 %v77, %v73
    %v80 = vmul.f32 %v78, %v74
    %v81 = vadd.f32 %v79, %v80
    %v82 = vadd.f32 %v81, 0.0
    %v83 = vadd.f32 %v73, %v74
    %v84 = vadd.f32 %v83, 0.0
    %v85 = vld [vmem:[#allocation7] sm:$0xff]
    %v86 = vadd.f32 %v85, %v82
    %87 = vst [vmem:[#allocation7] sm:$0xff] %v86
    %v88 = vld [vmem:[#allocation8] sm:$0xff]
    %v89 = vadd.f32 %v88, %v84
    %90 = vst [vmem:[#allocation8] sm:$0xff] %v89
    // Predicated region
    $region22: #{tpu_custom_call.1} parent=1 // pred_check
      _
    $region23: #{tpu_custom_call.1} parent=1 // pred_check_branch
      %92 = sbr.rel (0) target = $region25
    $region24: #{tpu_custom_call.1} parent=1 // pred_region
      %s94 = ssub.s32 128, 128
      %95 = vsyncadd [#allocation4], %s94
      %s97 = sshll.u32 [#allocation7], 4
      %s98 = int_to_ptr.vmem [resolvable:$true] %s97
      %100 = dma.vmem_to_hbm [thread:$0]  %s98, 128, %s2, [#allocation4]
    $region25: #{tpu_custom_call.1} parent=1 // pred_fallthru
      _
    // Predicated region
    $region26: #{tpu_custom_call.1} parent=1 // pred_check
      _
    $region27: #{tpu_custom_call.1} parent=1 // pred_check_branch
      %102 = sbr.rel (0) target = $region29
    $region28: #{tpu_custom_call.1} parent=1 // pred_region
      %s104 = ssub.s32 128, 128
      %105 = vsyncadd [#allocation9], %s104
      %s107 = sshll.u32 [#allocation8], 4
      %s108 = int_to_ptr.vmem [resolvable:$true] %s107
      %110 = dma.vmem_to_hbm [thread:$0]  %s108, 128, %s3, [#allocation9]
    $region29: #{tpu_custom_call.1} parent=1 // pred_fallthru
      _
    // Predicated region
    $region30: #{tpu_custom_call.1} parent=1 // pred_check
      _
    $region31: #{tpu_custom_call.1} parent=1 // pred_check_branch
      %112 = sbr.rel (0) target = $region33
    $region32: #{tpu_custom_call.1} parent=1 // pred_region
      %113 = dma.done [#allocation4], 128
    $region33: #{tpu_custom_call.1} parent=1 // pred_fallthru
      _
    // Predicated region
    $region34: #{tpu_custom_call.1} parent=1 // pred_check
      _
    $region35: #{tpu_custom_call.1} parent=1 // pred_check_branch
      %115 = sbr.rel (0) target = $region37
    $region36: #{tpu_custom_call.1} parent=1 // pred_region
      %116 = dma.done [#allocation9], 128
    $region37: #{tpu_custom_call.1} parent=1 // pred_fallthru
      _
    %117 = vsyncpa [#allocation3], 1
    %118 = vsyncpa [#allocation6], 1
    %119 = vsyncpa [#allocation4], 1
    %120 = vsyncpa [#allocation9], 1

</llo_original>
